<compile_context>
chip_gen: v7x
topology: tpu7x:2x2x1
jax: 0.10.0
libtpu: 0.0.40
codegen_flags: <defaults>
</compile_context>

<pallas_src>
import functools

import numpy as np

import jax
import jax.numpy as jnp
from jax.experimental import pallas as pl
from jax.experimental.pallas import tpu as pltpu


def _silu(t):
    return t * jax.nn.sigmoid(t)


def _softmax_last(t, *, approx):
    """Softmax over the last axis.  approx=True uses the EUP reciprocal."""
    e = jnp.exp(t - jnp.max(t, axis=-1, keepdims=True))
    s = jnp.sum(e, axis=-1, keepdims=True)
    if approx:
        return e * pl.reciprocal(s, approx=True)
    return e / s


def scam_kernel(x_ref, wf_ref, bf_ref, mw_ref, scal_ref, o_ref,
                *, c, matmul_dtype):
    nb = x_ref.shape[0]
    cp = wf_ref.shape[0]

    # m2 (2->1 conv, BN folded) parameters from the scalar path (SMEM).
    m2w0 = scal_ref[0]
    m2w1 = scal_ref[1]
    m2b = scal_ref[2]

    wf = wf_ref[...]                                   # (Cp, C)  matmul dtype
    bf = bf_ref[...]                                   # (Cp, 1)  f32
    mw = mw_ref[...]                                   # (C, Cp)  f32, cols >= C are zero

    x_io = x_ref[...]                                  # (Nb, C, HW) io dtype
    x32 = x_io if x_io.dtype == jnp.float32 else x_io.astype(jnp.float32)

    # ---- global avg / max pool over spatial + channel softmax (exact divide)
    avg_sm = _softmax_last(jnp.mean(x32, axis=2), approx=False)      # (Nb, C)
    max_sm = _softmax_last(jnp.max(x32, axis=2), approx=False)       # (Nb, C)

    # Fold the linear m2 conv into the pooled vectors; zero-pad to Cp columns
    # so the gate matvec contracts over all Cp rows of `fused` (row C = k
    # branch, rows > C = 0) without ever slicing out `v`.
    comb = m2w0 * avg_sm + m2w1 * max_sm                             # (Nb, C)
    comb = jnp.concatenate(
        [comb, jnp.zeros((nb, cp - c), jnp.float32)], axis=1)        # (Nb, Cp)

    # ---- per-image MXU work (nb is a small compile-time constant) ----------
    for i in range(nb):
        xi_mm = (x_io[i] if x_io.dtype == matmul_dtype
                 else x32[i].astype(matmul_dtype))                   # (C, HW)

        # Fused k + v 1x1 convs: single MXU pass, f32 accumulation, SiLU.
        f = jnp.dot(wf, xi_mm, preferred_element_type=jnp.float32)   # (Cp, HW)
        f = _silu(f + bf)

        # k branch: spatial softmax of row C (EUP approx reciprocal).
        ksm = _softmax_last(f[c:c + 1, :], approx=True)              # (1, HW)

        # y = v @ ksm^T on the MXU (K = HW); padded/k rows handled via mw.
        yv = jnp.einsum('rh,qh->rq', f, ksm,
                        preferred_element_type=jnp.float32)          # (Cp, 1)

        # m branch: (C, Cp) @ (Cp, 1) matvec; zero columns kill k/pad rows.
        m_y = _silu(jnp.dot(mw, yv,
                            preferred_element_type=jnp.float32))     # (C, 1)

        # Gate: one (1, Cp) @ (Cp, HW) matvec realizes m2(cat(y_avg, y_max)).
        gate_pre = jnp.dot(comb[i:i + 1, :], f,
                           preferred_element_type=jnp.float32) + m2b  # (1, HW)
        gate = jax.nn.sigmoid(_silu(gate_pre))

        # Residual add; explicitly typed store.
        o_ref[i] = (x32[i] + m_y * gate).astype(o_ref.dtype)


def _round_up(v, m):
    return (v + m - 1) // m * m


_MAX_NB = 8                    # static per-image unroll cap (code size)
_VMEM_BUDGET = 24 << 20        # target live bytes per grid step for nb choice
_VMEM_LIMIT_CAP = 48 << 20     # < 64 MiB v7x physical; safe on v5e/v6e too


def _is_v7x():
    try:
        return "v7" in jax.devices()[0].device_kind.lower()
    except Exception:
        return False


def _choose_block(n, c, cp, hw, io_bytes, out_bytes):
    """Pick images-per-step with honest VMEM accounting, return (nb, limit)."""
    # Double-buffered x / out blocks + the f32 working copy / residual temp.
    per_image = c * hw * (2 * io_bytes + 2 * out_bytes + 4)
    # Fused (Cp, HW) tile + small per-image temps + (double-buffered) weights.
    fixed = 2 * cp * hw * 4 + 4 * (cp * c + c * cp) * 4
    cap = max(1, (_VMEM_BUDGET - fixed) // max(per_image, 1))
    nb = int(min(cap, n, _MAX_NB))
    if _is_v7x() and n >= 2:
        nb = min(nb, max(1, n // 2))   # keep >=2 steps: feed both v7x TCs
    nb = max(nb, 1)
    while n % nb:                       # make nb a divisor of n
        nb -= 1
    est = fixed + nb * per_image
    vmem_limit = int(min(_VMEM_LIMIT_CAP, max(32 << 20, est + (8 << 20))))
    return nb, vmem_limit


def scam_forward(x_nchw, params, *, matmul_dtype=jnp.float32, io_dtype=None):
    """SCAM forward.  matmul_dtype=jnp.bfloat16 (recommended in production on
    v5e/v6e/v7x) also switches the kernel input to bf16 I/O; f32 elementwise
    math and f32 MXU accumulation are kept either way."""
    kw, kb, vw, vb, mw, m2w, m2b = params
    n, c, h, w = x_nchw.shape
    hw = h * w

    if io_dtype is None:
        io_dtype = jnp.bfloat16 if matmul_dtype == jnp.bfloat16 else x_nchw.dtype

    xf = x_nchw.reshape(n, c, hw).astype(io_dtype)

    # Fused (v | k) weight/bias: rows 0..C-1 = v conv, row C = k conv,
    # padded up to a multiple of 8 sublanes (padded rows are zero).
    cp = _round_up(c + 1, 8)
    wf = (jnp.zeros((cp, c), jnp.float32)
          .at[:c].set(vw).at[c].set(kw[0])).astype(matmul_dtype)
    bf = jnp.zeros((cp, 1), jnp.float32).at[:c, 0].set(vb).at[c, 0].set(kb)
    # m conv weight, zero-padded to Cp input columns (kills k / pad rows of y).
    mw_pad = jnp.zeros((c, cp), jnp.float32).at[:, :c].set(mw)
    scalars = jnp.array([m2w[0], m2w[1], m2b], jnp.float32)       # -> SMEM

    io_bytes = np.dtype(io_dtype).itemsize
    out_bytes = np.dtype(x_nchw.dtype).itemsize
    nb, vmem_limit = _choose_block(n, c, cp, hw, io_bytes, out_bytes)
    grid = (n // nb,)

    kernel = functools.partial(scam_kernel, c=c, matmul_dtype=matmul_dtype)

    out = pl.pallas_call(
        kernel,
        out_shape=jax.ShapeDtypeStruct((n, c, hw), x_nchw.dtype),
        grid_spec=pltpu.PrefetchScalarGridSpec(
            num_scalar_prefetch=0,
            grid=grid,
            in_specs=[
                pl.BlockSpec((nb, c, hw), lambda b: (b, 0, 0)),     # x
                pl.BlockSpec((cp, c), lambda b: (0, 0)),            # fused (v|k) W
                pl.BlockSpec((cp, 1), lambda b: (0, 0)),            # fused (v|k) bias
                pl.BlockSpec((c, cp), lambda b: (0, 0)),            # m weight (padded)
                pl.BlockSpec(memory_space=pltpu.MemorySpace.SMEM),  # [m2w0, m2w1, m2b]
            ],
            out_specs=pl.BlockSpec((nb, c, hw), lambda b: (b, 0, 0)),
        ),
        compiler_params=pltpu.CompilerParams(
            dimension_semantics=("parallel",),
            vmem_limit_bytes=vmem_limit),
    )(xf, wf, bf, mw_pad, scalars)

    return out.reshape(n, c, h, w)


def make_params(c, key):
    """Deterministic params; BatchNorm in eval mode with default running
    stats (mean=0, var=1, eps=1e-5) folded into conv scale/shift."""
    eps = 1e-5
    ks = jax.random.split(key, 8)

    def bn_fold(gamma, beta):
        return gamma / jnp.sqrt(1.0 + eps), beta      # running_var=1, mean=0

    # k: Conv(c -> 1) + BN(1) + SiLU
    kw_raw = jax.random.normal(ks[0], (1, c), jnp.float32) * 0.3
    kg = 1.0 + 0.1 * jax.random.normal(ks[1], (1,), jnp.float32)
    kbeta = 0.1 * jax.random.normal(ks[2], (1,), jnp.float32)
    ksc, ksh = bn_fold(kg, kbeta)
    kw = kw_raw * ksc[:, None]
    kb = ksh[0]

    # v: Conv(c -> c) + BN(c) + SiLU
    vw_raw = jax.random.normal(ks[3], (c, c), jnp.float32) * 0.3
    vg = 1.0 + 0.1 * jax.random.normal(ks[4], (c,), jnp.float32)
    vbeta = 0.1 * jax.random.normal(ks[5], (c,), jnp.float32)
    vsc, vsh = bn_fold(vg, vbeta)
    vw = vw_raw * vsc[:, None]
    vb = vsh

    # m: Conv_withoutBN(c -> c), no bias, SiLU
    mw = jax.random.normal(ks[6], (c, c), jnp.float32) * 0.3

    # m2: Conv(2 -> 1) + BN(1) + SiLU
    m2w_raw = jax.random.normal(ks[7], (1, 2), jnp.float32) * 0.3
    m2sc, m2sh = bn_fold(jnp.ones((1,)), jnp.zeros((1,)))
    m2w = (m2w_raw * m2sc[:, None])[0]                # (2,)
    m2b = m2sh[0]

    return (kw, kb, vw, vb, mw, m2w, m2b)


def scam_reference(x, params):
    """Pure-JAX reference of the PyTorch SCAM forward (BN folded identically)."""
    kw, kb, vw, vb, mw, m2w, m2b = params
    n, c, h, w = x.shape
    hw = h * w
    xf = x.reshape(n, c, hw)

    avg_sm = jax.nn.softmax(xf.mean(-1), axis=1)                      # (n, c)
    max_sm = jax.nn.softmax(xf.max(-1), axis=1)                       # (n, c)

    k = _silu(jnp.einsum('oc,nch->noh', kw, xf) + kb)                 # (n, 1, hw)
    k = jax.nn.softmax(k, axis=2)
    v = _silu(jnp.einsum('oc,nch->noh', vw, xf) + vb[None, :, None])  # (n, c, hw)

    y = jnp.einsum('nch,nh->nc', v, k[:, 0, :])                       # (n, c)
    y_avg = jnp.einsum('nc,nch->nh', avg_sm, v)                       # (n, hw)
    y_max = jnp.einsum('nc,nch->nh', max_sm, v)                       # (n, hw)

    m_y = _silu(jnp.einsum('oc,nc->no', mw, y))                       # (n, c)
    gate = jax.nn.sigmoid(_silu(m2w[0] * y_avg + m2w[1] * y_max + m2b))

    out = xf + m_y[:, :, None] * gate[:, None, :]
    return out.reshape(n, c, h, w)


if __name__ == "__main__":
    key = jax.random.PRNGKey(0)
    kx, kp = jax.random.split(key)

    N, C, H, W = 2, 4, 16, 16
    x = jax.random.normal(kx, (N, C, H, W), jnp.float32)
    params = make_params(C, kp)

    out = jax.block_until_ready(scam_forward(x, params))
    ref = scam_reference(x, params)

    # Tolerance covers the EUP approximate reciprocal in the spatial k-softmax.
    if not jnp.allclose(out, ref, atol=5e-3, rtol=5e-3):
        err = float(jnp.max(jnp.abs(out - ref)))
        raise AssertionError(
            f"Pallas SCAM kernel mismatch vs reference (max abs err {err:.3e})")

    print("KERNEL_OK")
</pallas_src>

<mosaic_0001>
module attributes {stable_mosaic.version = 11 : i64} {
  func.func @scam_kernel(%arg0: i32, %arg1: memref<2x4x256xf32, #tpu.memory_space<vmem>>, %arg2: memref<8x4xf32, #tpu.memory_space<vmem>>, %arg3: memref<8x1xf32, #tpu.memory_space<vmem>>, %arg4: memref<4x8xf32, #tpu.memory_space<vmem>>, %arg5: memref<3xf32, #tpu.memory_space<smem>>, %arg6: memref<2x4x256xf32, #tpu.memory_space<vmem>>) attributes {dimension_semantics = [#tpu.dimension_semantics<parallel>], iteration_bounds = array<i64: 1>, scalar_prefetch = 0 : i64, scratch_operands = 0 : i64, tpu.core_type = #tpu.core_type<tc>, window_params = [{transform_indices = @transform_0, window_bounds = array<i64: 2, 4, 256>}, {pipeline_mode = #tpu.pipeline_mode<synchronous>, transform_indices = @transform_1, window_bounds = array<i64: 8, 4>}, {pipeline_mode = #tpu.pipeline_mode<synchronous>, transform_indices = @transform_2, window_bounds = array<i64: 8, 1>}, {pipeline_mode = #tpu.pipeline_mode<synchronous>, transform_indices = @transform_3, window_bounds = array<i64: 4, 8>}, {transform_indices = @transform_4, window_bounds = array<i64: 3>}, {transform_indices = @transform_5, window_bounds = array<i64: 2, 4, 256>}]} {
    %c0 = arith.constant 0 : index
    %0 = memref.load %arg5[%c0] : memref<3xf32, #tpu.memory_space<smem>>
    %c1 = arith.constant 1 : index
    %1 = memref.load %arg5[%c1] : memref<3xf32, #tpu.memory_space<smem>>
    %c2 = arith.constant 2 : index
    %2 = memref.load %arg5[%c2] : memref<3xf32, #tpu.memory_space<smem>>
    %c0_0 = arith.constant 0 : index
    %c0_1 = arith.constant 0 : index
    %3 = vector.load %arg2[%c0_0, %c0_1] : memref<8x4xf32, #tpu.memory_space<vmem>>, vector<8x4xf32>
    %c0_2 = arith.constant 0 : index
    %c0_3 = arith.constant 0 : index
    %4 = vector.load %arg3[%c0_2, %c0_3] : memref<8x1xf32, #tpu.memory_space<vmem>>, vector<8x1xf32>
    %c0_4 = arith.constant 0 : index
    %c0_5 = arith.constant 0 : index
    %5 = vector.load %arg4[%c0_4, %c0_5] : memref<4x8xf32, #tpu.memory_space<vmem>>, vector<4x8xf32>
    %c0_6 = arith.constant 0 : index
    %c0_7 = arith.constant 0 : index
    %c0_8 = arith.constant 0 : index
    %6 = vector.load %arg1[%c0_6, %c0_7, %c0_8] : memref<2x4x256xf32, #tpu.memory_space<vmem>>, vector<2x4x256xf32>
    %cst = arith.constant dense<0.000000e+00> : vector<2x4xf32>
    %7 = vector.multi_reduction <add>, %6, %cst [2] : vector<2x4x256xf32> to vector<2x4xf32>
    %cst_9 = arith.constant 2.560000e+02 : f32
    %8 = vector.broadcast %cst_9 : f32 to vector<2x4xf32>
    %9 = arith.divf %7, %8 : vector<2x4xf32>
    %cst_10 = arith.constant dense<0xFF800000> : vector<2xf32>
    %10 = vector.multi_reduction <maximumf>, %9, %cst_10 [1] : vector<2x4xf32> to vector<2xf32>
    %11 = vector.shape_cast %10 : vector<2xf32> to vector<2x1xf32>
    %12 = vector.broadcast %11 : vector<2x1xf32> to vector<2x4xf32>
    %13 = arith.subf %9, %12 : vector<2x4xf32>
    %14 = math.exp %13 : vector<2x4xf32>
    %cst_11 = arith.constant dense<0.000000e+00> : vector<2xf32>
    %15 = vector.multi_reduction <add>, %14, %cst_11 [1] : vector<2x4xf32> to vector<2xf32>
    %16 = vector.shape_cast %15 : vector<2xf32> to vector<2x1xf32>
    %17 = vector.broadcast %16 : vector<2x1xf32> to vector<2x4xf32>
    %18 = arith.divf %14, %17 : vector<2x4xf32>
    %cst_12 = arith.constant dense<0xFF800000> : vector<2x4xf32>
    %19 = vector.multi_reduction <maximumf>, %6, %cst_12 [2] : vector<2x4x256xf32> to vector<2x4xf32>
    %cst_13 = arith.constant dense<0xFF800000> : vector<2xf32>
    %20 = vector.multi_reduction <maximumf>, %19, %cst_13 [1] : vector<2x4xf32> to vector<2xf32>
    %21 = vector.shape_cast %20 : vector<2xf32> to vector<2x1xf32>
    %22 = vector.broadcast %21 : vector<2x1xf32> to vector<2x4xf32>
    %23 = arith.subf %19, %22 : vector<2x4xf32>
    %24 = math.exp %23 : vector<2x4xf32>
    %cst_14 = arith.constant dense<0.000000e+00> : vector<2xf32>
    %25 = vector.multi_reduction <add>, %24, %cst_14 [1] : vector<2x4xf32> to vector<2xf32>
    %26 = vector.shape_cast %25 : vector<2xf32> to vector<2x1xf32>
    %27 = vector.broadcast %26 : vector<2x1xf32> to vector<2x4xf32>
    %28 = arith.divf %24, %27 : vector<2x4xf32>
    %29 = vector.broadcast %0 : f32 to vector<2x4xf32>
    %30 = arith.mulf %29, %18 : vector<2x4xf32>
    %31 = vector.broadcast %1 : f32 to vector<2x4xf32>
    %32 = arith.mulf %31, %28 : vector<2x4xf32>
    %33 = arith.addf %30, %32 : vector<2x4xf32>
    %cst_15 = arith.constant 0.000000e+00 : f32
    %34 = vector.broadcast %cst_15 : f32 to vector<2x4xf32>
    %35 = tpu.concatenate %33, %34 in 1 : vector<2x4xf32>, vector<2x4xf32> -> vector<2x8xf32>
    %36 = vector.extract_strided_slice %6 {offsets = [0, 0, 0], sizes = [1, 4, 256], strides = [1, 1, 1]} : vector<2x4x256xf32> to vector<1x4x256xf32>
    %37 = vector.shape_cast %36 : vector<1x4x256xf32> to vector<4x256xf32>
    %cst_16 = arith.constant dense<0.000000e+00> : vector<8x256xf32>
    %38 = tpu.matmul %3, %37, %cst_16 {dimension_numbers = #tpu.dot_dimension_numbers<[1], [0], [0], [1], [0, 0, 1, 1], [], []>} : vector<8x4xf32>, vector<4x256xf32>, vector<8x256xf32> -> vector<8x256xf32>
    %39 = vector.broadcast %4 : vector<8x1xf32> to vector<8x256xf32>
    %40 = arith.addf %38, %39 : vector<8x256xf32>
    %41 = arith.negf %40 : vector<8x256xf32>
    %42 = math.exp %41 : vector<8x256xf32>
    %cst_17 = arith.constant 1.000000e+00 : f32
    %43 = vector.broadcast %cst_17 : f32 to vector<8x256xf32>
    %44 = arith.addf %43, %42 : vector<8x256xf32>
    %45 = arith.divf %43, %44 : vector<8x256xf32>
    %46 = arith.mulf %40, %45 : vector<8x256xf32>
    %47 = vector.extract_strided_slice %46 {offsets = [4, 0], sizes = [1, 256], strides = [1, 1]} : vector<8x256xf32> to vector<1x256xf32>
    %cst_18 = arith.constant dense<0xFF800000> : vector<1xf32>
    %48 = vector.multi_reduction <maximumf>, %47, %cst_18 [1] : vector<1x256xf32> to vector<1xf32>
    %49 = vector.shape_cast %48 : vector<1xf32> to vector<1x1xf32>
    %50 = vector.broadcast %49 : vector<1x1xf32> to vector<1x256xf32>
    %51 = arith.subf %47, %50 : vector<1x256xf32>
    %52 = math.exp %51 : vector<1x256xf32>
    %cst_19 = arith.constant dense<0.000000e+00> : vector<1xf32>
    %53 = vector.multi_reduction <add>, %52, %cst_19 [1] : vector<1x256xf32> to vector<1xf32>
    %54 = vector.shape_cast %53 : vector<1xf32> to vector<1x1xf32>
    %55 = tpu.reciprocal %54 {approx = true} : vector<1x1xf32> -> vector<1x1xf32>
    %56 = vector.broadcast %55 : vector<1x1xf32> to vector<1x256xf32>
    %57 = arith.mulf %52, %56 : vector<1x256xf32>
    "tpu.trace_start"() <{level = 10 : i32, message = "rh,qh->rq"}> : () -> ()
    %cst_20 = arith.constant dense<0.000000e+00> : vector<8x1xf32>
    %58 = tpu.matmul %46, %57, %cst_20 {dimension_numbers = #tpu.dot_dimension_numbers<[1], [1], [0], [0], [0, 0, 1, 0], [], []>} : vector<8x256xf32>, vector<1x256xf32>, vector<8x1xf32> -> vector<8x1xf32>
    "tpu.trace_stop"() : () -> ()
    %cst_21 = arith.constant dense<0.000000e+00> : vector<4x1xf32>
    %59 = tpu.matmul %5, %58, %cst_21 {dimension_numbers = #tpu.dot_dimension_numbers<[1], [0], [0], [1], [0, 0, 1, 1], [], []>} : vector<4x8xf32>, vector<8x1xf32>, vector<4x1xf32> -> vector<4x1xf32>
    %60 = arith.negf %59 : vector<4x1xf32>
    %61 = math.exp %60 : vector<4x1xf32>
    %cst_22 = arith.constant 1.000000e+00 : f32
    %62 = vector.broadcast %cst_22 : f32 to vector<4x1xf32>
    %63 = arith.addf %62, %61 : vector<4x1xf32>
    %64 = arith.divf %62, %63 : vector<4x1xf32>
    %65 = arith.mulf %59, %64 : vector<4x1xf32>
    %66 = vector.extract_strided_slice %35 {offsets = [0, 0], sizes = [1, 8], strides = [1, 1]} : vector<2x8xf32> to vector<1x8xf32>
    %cst_23 = arith.constant dense<0.000000e+00> : vector<1x256xf32>
    %67 = tpu.matmul %66, %46, %cst_23 {dimension_numbers = #tpu.dot_dimension_numbers<[1], [0], [0], [1], [0, 0, 1, 1], [], []>} : vector<1x8xf32>, vector<8x256xf32>, vector<1x256xf32> -> vector<1x256xf32>
    %68 = vector.broadcast %2 : f32 to vector<1x256xf32>
    %69 = arith.addf %67, %68 : vector<1x256xf32>
    %70 = arith.negf %69 : vector<1x256xf32>
    %71 = math.exp %70 : vector<1x256xf32>
    %cst_24 = arith.constant 1.000000e+00 : f32
    %72 = vector.broadcast %cst_24 : f32 to vector<1x256xf32>
    %73 = arith.addf %72, %71 : vector<1x256xf32>
    %74 = arith.divf %72, %73 : vector<1x256xf32>
    %75 = arith.mulf %69, %74 : vector<1x256xf32>
    %76 = arith.negf %75 : vector<1x256xf32>
    %77 = math.exp %76 : vector<1x256xf32>
    %cst_25 = arith.constant 1.000000e+00 : f32
    %78 = vector.broadcast %cst_25 : f32 to vector<1x256xf32>
    %79 = arith.addf %78, %77 : vector<1x256xf32>
    %80 = arith.divf %78, %79 : vector<1x256xf32>
    %81 = vector.extract_strided_slice %6 {offsets = [0, 0, 0], sizes = [1, 4, 256], strides = [1, 1, 1]} : vector<2x4x256xf32> to vector<1x4x256xf32>
    %82 = vector.shape_cast %81 : vector<1x4x256xf32> to vector<4x256xf32>
    %83 = vector.broadcast %65 : vector<4x1xf32> to vector<4x256xf32>
    %84 = vector.broadcast %80 : vector<1x256xf32> to vector<4x256xf32>
    %85 = arith.mulf %83, %84 : vector<4x256xf32>
    %86 = arith.addf %82, %85 : vector<4x256xf32>
    %c0_26 = arith.constant 0 : index
    %c0_27 = arith.constant 0 : index
    %c0_28 = arith.constant 0 : index
    %87 = vector.load %arg6[%c0_26, %c0_27, %c0_28] : memref<2x4x256xf32, #tpu.memory_space<vmem>>, vector<1x4x256xf32>
    %88 = vector.shape_cast %87 : vector<1x4x256xf32> to vector<4x256xf32>
    %89 = vector.shape_cast %86 : vector<4x256xf32> to vector<1x4x256xf32>
    tpu.vector_store %arg6[%c0_26, %c0_27, %c0_28], %89 {strides = array<i32>} : memref<2x4x256xf32, #tpu.memory_space<vmem>>, vector<1x4x256xf32>,
    %90 = vector.extract_strided_slice %6 {offsets = [1, 0, 0], sizes = [1, 4, 256], strides = [1, 1, 1]} : vector<2x4x256xf32> to vector<1x4x256xf32>
    %91 = vector.shape_cast %90 : vector<1x4x256xf32> to vector<4x256xf32>
    %cst_29 = arith.constant dense<0.000000e+00> : vector<8x256xf32>
    %92 = tpu.matmul %3, %91, %cst_29 {dimension_numbers = #tpu.dot_dimension_numbers<[1], [0], [0], [1], [0, 0, 1, 1], [], []>} : vector<8x4xf32>, vector<4x256xf32>, vector<8x256xf32> -> vector<8x256xf32>
    %93 = vector.broadcast %4 : vector<8x1xf32> to vector<8x256xf32>
    %94 = arith.addf %92, %93 : vector<8x256xf32>
    %95 = arith.negf %94 : vector<8x256xf32>
    %96 = math.exp %95 : vector<8x256xf32>
    %cst_30 = arith.constant 1.000000e+00 : f32
    %97 = vector.broadcast %cst_30 : f32 to vector<8x256xf32>
    %98 = arith.addf %97, %96 : vector<8x256xf32>
    %99 = arith.divf %97, %98 : vector<8x256xf32>
    %100 = arith.mulf %94, %99 : vector<8x256xf32>
    %101 = vector.extract_strided_slice %100 {offsets = [4, 0], sizes = [1, 256], strides = [1, 1]} : vector<8x256xf32> to vector<1x256xf32>
    %cst_31 = arith.constant dense<0xFF800000> : vector<1xf32>
    %102 = vector.multi_reduction <maximumf>, %101, %cst_31 [1] : vector<1x256xf32> to vector<1xf32>
    %103 = vector.shape_cast %102 : vector<1xf32> to vector<1x1xf32>
    %104 = vector.broadcast %103 : vector<1x1xf32> to vector<1x256xf32>
    %105 = arith.subf %101, %104 : vector<1x256xf32>
    %106 = math.exp %105 : vector<1x256xf32>
    %cst_32 = arith.constant dense<0.000000e+00> : vector<1xf32>
    %107 = vector.multi_reduction <add>, %106, %cst_32 [1] : vector<1x256xf32> to vector<1xf32>
    %108 = vector.shape_cast %107 : vector<1xf32> to vector<1x1xf32>
    %109 = tpu.reciprocal %108 {approx = true} : vector<1x1xf32> -> vector<1x1xf32>
    %110 = vector.broadcast %109 : vector<1x1xf32> to vector<1x256xf32>
    %111 = arith.mulf %106, %110 : vector<1x256xf32>
    "tpu.trace_start"() <{level = 10 : i32, message = "rh,qh->rq"}> : () -> ()
    %cst_33 = arith.constant dense<0.000000e+00> : vector<8x1xf32>
    %112 = tpu.matmul %100, %111, %cst_33 {dimension_numbers = #tpu.dot_dimension_numbers<[1], [1], [0], [0], [0, 0, 1, 0], [], []>} : vector<8x256xf32>, vector<1x256xf32>, vector<8x1xf32> -> vector<8x1xf32>
    "tpu.trace_stop"() : () -> ()
    %cst_34 = arith.constant dense<0.000000e+00> : vector<4x1xf32>
    %113 = tpu.matmul %5, %112, %cst_34 {dimension_numbers = #tpu.dot_dimension_numbers<[1], [0], [0], [1], [0, 0, 1, 1], [], []>} : vector<4x8xf32>, vector<8x1xf32>, vector<4x1xf32> -> vector<4x1xf32>
    %114 = arith.negf %113 : vector<4x1xf32>
    %115 = math.exp %114 : vector<4x1xf32>
    %cst_35 = arith.constant 1.000000e+00 : f32
    %116 = vector.broadcast %cst_35 : f32 to vector<4x1xf32>
    %117 = arith.addf %116, %115 : vector<4x1xf32>
    %118 = arith.divf %116, %117 : vector<4x1xf32>
    %119 = arith.mulf %113, %118 : vector<4x1xf32>
    %120 = vector.extract_strided_slice %35 {offsets = [1, 0], sizes = [1, 8], strides = [1, 1]} : vector<2x8xf32> to vector<1x8xf32>
    %cst_36 = arith.constant dense<0.000000e+00> : vector<1x256xf32>
    %121 = tpu.matmul %120, %100, %cst_36 {dimension_numbers = #tpu.dot_dimension_numbers<[1], [0], [0], [1], [0, 0, 1, 1], [], []>} : vector<1x8xf32>, vector<8x256xf32>, vector<1x256xf32> -> vector<1x256xf32>
    %122 = vector.broadcast %2 : f32 to vector<1x256xf32>
    %123 = arith.addf %121, %122 : vector<1x256xf32>
    %124 = arith.negf %123 : vector<1x256xf32>
    %125 = math.exp %124 : vector<1x256xf32>
    %cst_37 = arith.constant 1.000000e+00 : f32
    %126 = vector.broadcast %cst_37 : f32 to vector<1x256xf32>
    %127 = arith.addf %126, %125 : vector<1x256xf32>
    %128 = arith.divf %126, %127 : vector<1x256xf32>
    %129 = arith.mulf %123, %128 : vector<1x256xf32>
    %130 = arith.negf %129 : vector<1x256xf32>
    %131 = math.exp %130 : vector<1x256xf32>
    %cst_38 = arith.constant 1.000000e+00 : f32
    %132 = vector.broadcast %cst_38 : f32 to vector<1x256xf32>
    %133 = arith.addf %132, %131 : vector<1x256xf32>
    %134 = arith.divf %132, %133 : vector<1x256xf32>
    %135 = vector.extract_strided_slice %6 {offsets = [1, 0, 0], sizes = [1, 4, 256], strides = [1, 1, 1]} : vector<2x4x256xf32> to vector<1x4x256xf32>
    %136 = vector.shape_cast %135 : vector<1x4x256xf32> to vector<4x256xf32>
    %137 = vector.broadcast %119 : vector<4x1xf32> to vector<4x256xf32>
    %138 = vector.broadcast %134 : vector<1x256xf32> to vector<4x256xf32>
    %139 = arith.mulf %137, %138 : vector<4x256xf32>
    %140 = arith.addf %136, %139 : vector<4x256xf32>
    %c1_39 = arith.constant 1 : index
    %c0_40 = arith.constant 0 : index
    %c0_41 = arith.constant 0 : index
    %141 = vector.load %arg6[%c1_39, %c0_40, %c0_41] : memref<2x4x256xf32, #tpu.memory_space<vmem>>, vector<1x4x256xf32>
    %142 = vector.shape_cast %141 : vector<1x4x256xf32> to vector<4x256xf32>
    %143 = vector.shape_cast %140 : vector<4x256xf32> to vector<1x4x256xf32>
    tpu.vector_store %arg6[%c1_39, %c0_40, %c0_41], %143 {strides = array<i32>} : memref<2x4x256xf32, #tpu.memory_space<vmem>>, vector<1x4x256xf32>,
    return
  }
  func.func @transform_0(%arg0: i32) -> (i32, i32, i32) {
    %c0_i32 = arith.constant 0 : i32
    %c0_i32_0 = arith.constant 0 : i32
    %c0_i32_1 = arith.constant 0 : i32
    return %arg0, %c0_i32, %c0_i32_0 : i32, i32, i32
  }
  func.func @transform_1(%arg0: i32) -> (i32, i32) {
    %c0_i32 = arith.constant 0 : i32
    %c0_i32_0 = arith.constant 0 : i32
    %c0_i32_1 = arith.constant 0 : i32
    return %c0_i32, %c0_i32_0 : i32, i32
  }
  func.func @transform_2(%arg0: i32) -> (i32, i32) {
    %c0_i32 = arith.constant 0 : i32
    %c0_i32_0 = arith.constant 0 : i32
    %c0_i32_1 = arith.constant 0 : i32
    return %c0_i32, %c0_i32_0 : i32, i32
  }
  func.func @transform_3(%arg0: i32) -> (i32, i32) {
    %c0_i32 = arith.constant 0 : i32
    %c0_i32_0 = arith.constant 0 : i32
    %c0_i32_1 = arith.constant 0 : i32
    return %c0_i32, %c0_i32_0 : i32, i32
  }
  func.func @transform_4(%arg0: i32) -> i32 {
    %c0_i32 = arith.constant 0 : i32
    %c0_i32_0 = arith.constant 0 : i32
    return %c0_i32 : i32
  }
  func.func @transform_5(%arg0: i32) -> (i32, i32, i32) {
    %c0_i32 = arith.constant 0 : i32
    %c0_i32_0 = arith.constant 0 : i32
    %c0_i32_1 = arith.constant 0 : i32
    return %arg0, %c0_i32, %c0_i32_0 : i32, i32, i32
  }
}

</mosaic_0001>

<llo_original>
// kernel: tpu_custom_call.1
$region0: #{tpu_custom_call.1}
  #allocation0 [shape = 'u32[]', space=smem, size = 0x4, offset = 0x4, fixed_abs, tag = 'smem constant byte address 0x4 - core index']
  #allocation1 [shape = 'u32[144,128]{1,0:T(1,128)}', space=vmem, size = 0x12000, scoped, tag = 'internal scratch']
  %s0 = inlined_call_operand.vmem [shape: f32[2,4,256], index: 0, kind: input, shape index: {}]
  %s1 = inlined_call_operand.vmem [shape: f32[8,4], index: 1, kind: input, shape index: {}]
  %s2 = inlined_call_operand.vmem [shape: f32[8,1], index: 2, kind: input, shape index: {}]
  %s3 = inlined_call_operand.vmem [shape: f32[4,8], index: 3, kind: input, shape index: {}]
  %s4 = inlined_call_operand.vmem [shape: f32[3], index: 4, kind: input, shape index: {}]
  %s5 = inlined_call_operand.hbm [shape: f32[2,4,256], index: 5, kind: output, shape index: {}]
  %s6 = sld [smem:[#allocation0]]
  $region34: #{tpu_custom_call.1} parent=0
    _
  %s8 = ssub.s32 1, %s6
  %s9 = scalar_select 0, %s8, %s6
  $region1: #{tpu_custom_call.1} parent=0
    #allocation2 [shape = 'u8[512]{0}', space=smem, size = 0x200, scoped, tag = 'input window, operand 4, single buffered']
    #allocation3 [shape = 's32[1]{0}', space=sflag, size = 0x4, scoped, tag = 'scoped memory for tpu_custom_call.1']
    #allocation4 [shape = 's32[1]{0}', space=sflag, size = 0x4, scoped, tag = 'scoped memory for tpu_custom_call.1']
    #allocation5 [shape = 'u8[8192]{0}', space=vmem, size = 0x2000, scoped, tag = 'output window, operand 0, single buffered']
    %10 = vsyncpa [#allocation4], 0
    %11 = vsyncpa [#allocation3], 0
    // Predicated region
    $region2: #{tpu_custom_call.1} parent=1 // pred_check
      _
    $region3: #{tpu_custom_call.1} parent=1 // pred_check_branch
      %13 = sbr.rel (0) target = $region5
    $region4: #{tpu_custom_call.1} parent=1 // pred_region
      _
    $region5: #{tpu_custom_call.1} parent=1 // pred_fallthru
      _
    // Predicated region
    $region6: #{tpu_custom_call.1} parent=1 // pred_check
      _
    $region7: #{tpu_custom_call.1} parent=1 // pred_check_branch
      %15 = sbr.rel (0) target = $region9
    $region8: #{tpu_custom_call.1} parent=1 // pred_region
      _
    $region9: #{tpu_custom_call.1} parent=1 // pred_fallthru
      _
    // Predicated region
    $region10: #{tpu_custom_call.1} parent=1 // pred_check
      _
    $region11: #{tpu_custom_call.1} parent=1 // pred_check_branch
      %17 = sbr.rel (0) target = $region13
    $region12: #{tpu_custom_call.1} parent=1 // pred_region
      _
    $region13: #{tpu_custom_call.1} parent=1 // pred_fallthru
      _
    // Predicated region
    $region14: #{tpu_custom_call.1} parent=1 // pred_check
      _
    $region15: #{tpu_custom_call.1} parent=1 // pred_check_branch
      %19 = sbr.rel (0) target = $region17
    $region16: #{tpu_custom_call.1} parent=1 // pred_region
      _
    $region17: #{tpu_custom_call.1} parent=1 // pred_fallthru
      _
    // Predicated region
    $region18: #{tpu_custom_call.1} parent=1 // pred_check
      _
    $region19: #{tpu_custom_call.1} parent=1 // pred_check_branch
      %21 = sbr.rel (0) target = $region21
    $region20: #{tpu_custom_call.1} parent=1 // pred_region
      %s23 = ssub.s32 16, 16
      %24 = vsyncadd [#allocation4], %s23
      %s26 = sshll.u32 %s4, 4
      %s27 = int_to_ptr.vmem [resolvable:$true] %s26
      %29 = dma.vmem_to_smem %s27, 16, [#allocation2], [#allocation4]
    $region21: #{tpu_custom_call.1} parent=1 // pred_fallthru
      _
    // Predicated region
    $region22: #{tpu_custom_call.1} parent=1 // pred_check
      _
    $region23: #{tpu_custom_call.1} parent=1 // pred_check_branch
      %31 = sbr.rel (0) target = $region25
    $region24: #{tpu_custom_call.1} parent=1 // pred_region
      %32 = dma.done [#allocation4], 16
    $region25: #{tpu_custom_call.1} parent=1 // pred_fallthru
      _
    %33 = sfence
    %s34 = sld [smem:[#allocation2]]
    %s35 = sld [smem:[#allocation2 + $0x1]]
    %s36 = sld [smem:[#allocation2 + $0x2]]
    %v37 = vld [vmem:[%s1] sm:$0xff]
    %v38 = vld [vmem:[%s2] sm:$0xff]
    %v39 = vld [vmem:[%s3] sm:$0xf]
    %v40 = vld [vmem:[%s0] sm:$0xff]
    %v41 = vld [vmem:[%s0 + $0x8] sm:$0xff]
    %v44 = vcombine.high %v40, %v40
    %v45 = vcombine.high %v41, %v41
    %vm48 = vcmask 1043456
    %v49 = vsel %vm48, %v40, 0.0
    %v50 = vsel %vm48, %v44, 0.0
    %v51 = vadd.f32 %v49, %v50
    %52 = vadd.xlane.f32.xlu0 %v51
    %v53 = vpop.xlane.xlu0 %52
    %v54 = vsel %vm48, %v41, 0.0
    %v55 = vsel %vm48, %v45, 0.0
    %v56 = vadd.f32 %v54, %v55
    %57 = vadd.xlane.f32.xlu0 %v56
    %v58 = vpop.xlane.xlu0 %57
    %v59 = vrcp.pop 256.0
    %v60 = vmul.f32 %v53, %v59
    %v61 = vmul.f32 %v58, %v59
    %v64 = vlaneseq
    %v65 = vand.u32 %v64, 127
    %v66 = vlaneseq
    %v67 = vshrl.u32 %v66, 7
    %v68 = vsub.s32 %v65, %v67
    %v69 = vrot.slane %v60, %v68
    %v70 = vlaneseq
    %v71 = vshrl.u32 %v70, 7
    %v72 = vsub.s32 %v65, %v71
    %v73 = vrot.slane %v61, %v72
    %vm74 = vcmask 1041409
    %v75 = vsel %vm74, %v73, %v69
    %vm77 = vcmask 25600
    %v78 = vsel %vm77, %v75, -inf
    %79 = vmax.xlane.f32.xlu0 %v78
    %v80 = vpop.xlane.xlu0 %79
    %v82 = vlaneseq
    %v83 = vshrl.u32 %v82, 7
    %v84 = vsub.s32 0, %v83
    %v85 = vrot.slane %v80, %v84
    %v86 = vlaneseq
    %v87 = vshrl.u32 %v86, 7
    %v88 = vsub.s32 1, %v87
    %v89 = vrot.slane %v80, %v88
    %v92 = vsub.f32 %v60, %v85
    %v93 = vsub.f32 %v61, %v89
    %v94 = vmul.f32 %v92, 1.442695
    %v95 = vpow.pop %v94
    %v96 = vmul.f32 %v93, 1.442695
    %v97 = vpow.pop %v96
    %100 = vset.pattern.permute.xlu0 0
    %101 = vperm.xlu0 %100, %v95
    %v102 = vpop.permute.xlu0 %101
    %103 = vset.pattern.permute.xlu0 0
    %104 = vperm.xlu0 %103, %v97
    %v105 = vpop.permute.xlu0 %104
    %v106 = vlaneseq
    %v107 = vshrl.u32 %v106, 7
    %v108 = vsub.s32 %v65, %v107
    %v109 = vrot.slane %v102, %v108
    %v110 = vlaneseq
    %v111 = vshrl.u32 %v110, 7
    %v112 = vsub.s32 %v65, %v111
    %v113 = vrot.slane %v105, %v112
    %v114 = vsel %vm74, %v113, %v109
    %v116 = vsel %vm77, %v114, 0.0
    %117 = vadd.xlane.f32.xlu0 %v116
    %v118 = vpop.xlane.xlu0 %117
    %v120 = vlaneseq
    %v121 = vshrl.u32 %v120, 7
    %v122 = vsub.s32 0, %v121
    %v123 = vrot.slane %v118, %v122
    %v124 = vlaneseq
    %v125 = vshrl.u32 %v124, 7
    %v126 = vsub.s32 1, %v125
    %v127 = vrot.slane %v118, %v126
    %v130 = vrcp.pop %v123
    %v131 = vmul.f32 %v95, %v130
    %v132 = vrcp.pop %v127
    %v133 = vmul.f32 %v97, %v132
    %v134 = vsel %vm48, %v40, -inf
    %v135 = vsel %vm48, %v44, -inf
    %v136 = vmax.f32 %v134, %v135
    %137 = vmax.xlane.f32.xlu0 %v136
    %v138 = vpop.xlane.xlu0 %137
    %v139 = vsel %vm48, %v41, -inf
    %v140 = vsel %vm48, %v45, -inf
    %v141 = vmax.f32 %v139, %v140
    %142 = vmax.xlane.f32.xlu0 %v141
    %v143 = vpop.xlane.xlu0 %142
    %v146 = vlaneseq
    %v147 = vshrl.u32 %v146, 7
    %v148 = vsub.s32 %v65, %v147
    %v149 = vrot.slane %v138, %v148
    %v150 = vlaneseq
    %v151 = vshrl.u32 %v150, 7
    %v152 = vsub.s32 %v65, %v151
    %v153 = vrot.slane %v143, %v152
    %v154 = vsel %vm74, %v153, %v149
    %v156 = vsel %vm77, %v154, -inf
    %157 = vmax.xlane.f32.xlu0 %v156
    %v158 = vpop.xlane.xlu0 %157
    %v160 = vlaneseq
    %v161 = vshrl.u32 %v160, 7
    %v162 = vsub.s32 0, %v161
    %v163 = vrot.slane %v158, %v162
    %v164 = vlaneseq
    %v165 = vshrl.u32 %v164, 7
    %v166 = vsub.s32 1, %v165
    %v167 = vrot.slane %v158, %v166
    %v170 = vsub.f32 %v138, %v163
    %v171 = vsub.f32 %v143, %v167
    %v172 = vmul.f32 %v170, 1.442695
    %v173 = vpow.pop %v172
    %v174 = vmul.f32 %v171, 1.442695
    %v175 = vpow.pop %v174
    %178 = vset.pattern.permute.xlu0 0
    %179 = vperm.xlu0 %178, %v173
    %v180 = vpop.permute.xlu0 %179
    %181 = vset.pattern.permute.xlu0 0
    %182 = vperm.xlu0 %181, %v175
    %v183 = vpop.permute.xlu0 %182
    %v184 = vlaneseq
    %v185 = vshrl.u32 %v184, 7
    %v186 = vsub.s32 %v65, %v185
    %v187 = vrot.slane %v180, %v186
    %v188 = vlaneseq
    %v189 = vshrl.u32 %v188, 7
    %v190 = vsub.s32 %v65, %v189
    %v191 = vrot.slane %v183, %v190
    %v192 = vsel %vm74, %v191, %v187
    %v194 = vsel %vm77, %v192, 0.0
    %195 = vadd.xlane.f32.xlu0 %v194
    %v196 = vpop.xlane.xlu0 %195
    %v198 = vlaneseq
    %v199 = vshrl.u32 %v198, 7
    %v200 = vsub.s32 0, %v199
    %v201 = vrot.slane %v196, %v200
    %v202 = vlaneseq
    %v203 = vshrl.u32 %v202, 7
    %v204 = vsub.s32 1, %v203
    %v205 = vrot.slane %v196, %v204
    %v208 = vrcp.pop %v201
    %v209 = vmul.f32 %v173, %v208
    %v210 = vrcp.pop %v205
    %v211 = vmul.f32 %v175, %v210
    %v212 = vstv %s34
    %v213 = vmul.f32 %v212, %v131
    %v214 = vmul.f32 %v212, %v133
    %v215 = vstv %s35
    %v216 = vmul.f32 %v215, %v209
    %v217 = vmul.f32 %v215, %v211
    %v218 = vadd.f32 %v213, %v216
    %v219 = vadd.f32 %v214, %v217
    %222 = vset.pattern.permute.xlu0 0
    %223 = vperm.xlu0 %222, %v218
    %v224 = vpop.permute.xlu0 %223
    %225 = vset.pattern.permute.xlu0 0
    %226 = vperm.xlu0 %225, %v219
    %v227 = vpop.permute.xlu0 %226
    %v228 = vlaneseq
    %v229 = vshrl.u32 %v228, 7
    %v230 = vsub.s32 %v65, %v229
    %v231 = vrot.slane %v224, %v230
    %v232 = vlaneseq
    %v233 = vshrl.u32 %v232, 7
    %v234 = vsub.s32 %v65, %v233
    %v235 = vrot.slane %v227, %v234
    %v236 = vsel %vm74, %v235, %v231
    %vm238 = vcmask 31744
    %v239 = vsel %vm238, %v236, 0.0
    %241 = vset.pattern.permute.xlu0 0
    %242 = vperm.xlu0 %241, %v38
    %v243 = vpop.permute.xlu0 %242
    %v246 = vsel %vm238, %v37, 0
    %v248 = vsel %vm48, %v40, 0
    %v250 = vsel %vm48, %v44, 0
    %252 = vmatprep.subr.mxu0 %v250
    %253 = vmatpush1.msra.mxu0 %v248
    %254 = vmatprep.subr.mxu0 0.0
    %255 = vmatpush1.msra.mxu0 0.0
    %256 = vmatprep.subr.mxu0 0.0
    %257 = vmatpush1.msra.mxu0 0.0
    %258 = vmatprep.subr.mxu0 0.0
    %259 = vmatpush1.msra.mxu0 0.0
    %260 = vmatprep.subr.mxu0 0.0
    %261 = vmatpush1.msra.mxu0 0.0
    %262 = vmatprep.subr.mxu0 0.0
    %263 = vmatpush1.msra.mxu0 0.0
    %264 = vmatprep.subr.mxu0 0.0
    %265 = vmatpush1.msra.mxu0 0.0
    %266 = vmatprep.subr.mxu0 0.0
    %267 = vmatpush1.msra.mxu0 0.0
    %268 = vmatprep.subr.mxu0 0.0
    %269 = vmatpush1.msra.mxu0 0.0
    %270 = vmatprep.subr.mxu0 0.0
    %271 = vmatpush1.msra.mxu0 0.0
    %272 = vmatprep.subr.mxu0 0.0
    %273 = vmatpush1.msra.mxu0 0.0
    %274 = vmatprep.subr.mxu0 0.0
    %275 = vmatpush1.msra.mxu0 0.0
    %276 = vmatprep.subr.mxu0 0.0
    %277 = vmatpush1.msra.mxu0 0.0
    %278 = vmatprep.subr.mxu0 0.0
    %279 = vmatpush1.msra.mxu0 0.0
    %280 = vmatprep.subr.mxu0 0.0
    %281 = vmatpush1.msra.mxu0 0.0
    %282 = vmatprep.subr.mxu0 0.0
    %283 = vmatpush1.msra.mxu0 0.0
    %284 = vmatprep.subr.mxu0 0.0
    %285 = vmatpush1.msra.mxu0 0.0
    %286 = vmatprep.subr.mxu0 0.0
    %287 = vmatpush1.msra.mxu0 0.0
    %288 = vmatprep.subr.mxu0 0.0
    %289 = vmatpush1.msra.mxu0 0.0
    %290 = vmatprep.subr.mxu0 0.0
    %291 = vmatpush1.msra.mxu0 0.0
    %292 = vmatprep.subr.mxu0 0.0
    %293 = vmatpush1.msra.mxu0 0.0
    %294 = vmatprep.subr.mxu0 0.0
    %295 = vmatpush1.msra.mxu0 0.0
    %296 = vmatprep.subr.mxu0 0.0
    %297 = vmatpush1.msra.mxu0 0.0
    %298 = vmatprep.subr.mxu0 0.0
    %299 = vmatpush1.msra.mxu0 0.0
    %300 = vmatprep.subr.mxu0 0.0
    %301 = vmatpush1.msra.mxu0 0.0
    %302 = vmatprep.subr.mxu0 0.0
    %303 = vmatpush1.msra.mxu0 0.0
    %304 = vmatprep.subr.mxu0 0.0
    %305 = vmatpush1.msra.mxu0 0.0
    %306 = vmatprep.subr.mxu0 0.0
    %307 = vmatpush1.msra.mxu0 0.0
    %308 = vmatprep.subr.mxu0 0.0
    %309 = vmatpush1.msra.mxu0 0.0
    %310 = vmatprep.subr.mxu0 0.0
    %311 = vmatpush1.msra.mxu0 0.0
    %312 = vmatprep.subr.mxu0 0.0
    %313 = vmatpush1.msra.mxu0 0.0
    %314 = vmatprep.subr.mxu0 0.0
    %315 = vmatpush1.msra.mxu0 0.0
    %316 = vmatprep.mubr.f32.mxu0 0.0
    %317 = vmatmul.mubr.f32.gmra.mrb[0].mxu0 %v246
    %v318 = vpop.f32.mrb[0].mxu0
    %v319 = vadd.f32 %v243, %v318
    %v320 = vpop.f32.mrb[0].mxu0
    %v321 = vadd.f32 %v243, %v320
    %322 = vdwg.mxu0
    %v323 = vxor.u32 %v319, 2147483648
    %v324 = vxor.u32 %v321, 2147483648
    %v325 = vmul.f32 %v323, 1.442695
    %v326 = vpow.pop %v325
    %v327 = vmul.f32 %v324, 1.442695
    %v328 = vpow.pop %v327
    %v329 = vadd.f32 %v326, 1.0
    %v330 = vadd.f32 %v328, 1.0
    %v331 = vrcp.pop %v329
    %v332 = vmul.f32 1.0, %v331
    %v333 = vrcp.pop %v330
    %v334 = vmul.f32 1.0, %v333
    %v335 = vmul.f32 %v319, %v332
    %v336 = vmul.f32 %v321, %v334
    %vm337 = vcmask 1044484
    %v338 = vsel %vm337, %v335, -inf
    %v339 = vsel %vm337, %v336, -inf
    %v340 = vmax.f32 %v338, %v339
    %341 = vmax.xlane.f32.xlu0 %v340
    %v342 = vpop.xlane.xlu0 %341
    %v343 = vsub.f32 %v335, %v342
    %v344 = vsub.f32 %v336, %v342
    %v345 = vmul.f32 %v343, 1.442695
    %v346 = vpow.pop %v345
    %v347 = vmul.f32 %v344, 1.442695
    %v348 = vpow.pop %v347
    %v349 = vsel %vm337, %v346, 0.0
    %v350 = vsel %vm337, %v348, 0.0
    %v351 = vadd.f32 %v349, %v350
    %352 = vadd.xlane.f32.xlu0 %v351
    %v353 = vpop.xlane.xlu0 %352
    %v354 = vrcp.pop %v353
    %v355 = vmul.f32 %v346, %v354
    %v356 = vmul.f32 %v348, %v354
    %v357 = vlaneseq
    %v358 = vshrl.u32 %v357, 7
    %v359 = vsub.s32 4, %v358
    %v360 = vrot.slane %v355, %v359
    %v361 = vlaneseq
    %v362 = vshrl.u32 %v361, 7
    %v363 = vsub.s32 4, %v362
    %v364 = vrot.slane %v356, %v363
    %v365 = vmul.f32 %v335, %v360
    %v366 = vmul.f32 %v336, %v364
    %v367 = vadd.f32 %v365, %v366
    %368 = vadd.xlane.f32.xlu0 %v367
    %v369 = vpop.xlane.xlu0 %368
    %vm370 = vcmask 64512
    %v372 = vsel %vm370, %v39, 0
    %374 = vmatprep.subr.mxu0 0.0
    %375 = vmatpush1.msra.mxu0 %v369
    %376 = vmatprep.subr.mxu0 0.0
    %377 = vmatpush1.msra.mxu0 0.0
    %378 = vmatprep.subr.mxu0 0.0
    %379 = vmatpush1.msra.mxu0 0.0
    %380 = vmatprep.subr.mxu0 0.0
    %381 = vmatpush1.msra.mxu0 0.0
    %382 = vmatprep.subr.mxu0 0.0
    %383 = vmatpush1.msra.mxu0 0.0
    %384 = vmatprep.subr.mxu0 0.0
    %385 = vmatpush1.msra.mxu0 0.0
    %386 = vmatprep.subr.mxu0 0.0
    %387 = vmatpush1.msra.mxu0 0.0
    %388 = vmatprep.subr.mxu0 0.0
    %389 = vmatpush1.msra.mxu0 0.0
    %390 = vmatprep.subr.mxu0 0.0
    %391 = vmatpush1.msra.mxu0 0.0
    %392 = vmatprep.subr.mxu0 0.0
    %393 = vmatpush1.msra.mxu0 0.0
    %394 = vmatprep.subr.mxu0 0.0
    %395 = vmatpush1.msra.mxu0 0.0
    %396 = vmatprep.subr.mxu0 0.0
    %397 = vmatpush1.msra.mxu0 0.0
    %398 = vmatprep.subr.mxu0 0.0
    %399 = vmatpush1.msra.mxu0 0.0
    %400 = vmatprep.subr.mxu0 0.0
    %401 = vmatpush1.msra.mxu0 0.0
    %402 = vmatprep.subr.mxu0 0.0
    %403 = vmatpush1.msra.mxu0 0.0
    %404 = vmatprep.subr.mxu0 0.0
    %405 = vmatpush1.msra.mxu0 0.0
    %406 = vmatprep.subr.mxu0 0.0
    %407 = vmatpush1.msra.mxu0 0.0
    %408 = vmatprep.subr.mxu0 0.0
    %409 = vmatpush1.msra.mxu0 0.0
    %410 = vmatprep.subr.mxu0 0.0
    %411 = vmatpush1.msra.mxu0 0.0
    %412 = vmatprep.subr.mxu0 0.0
    %413 = vmatpush1.msra.mxu0 0.0
    %414 = vmatprep.subr.mxu0 0.0
    %415 = vmatpush1.msra.mxu0 0.0
    %416 = vmatprep.subr.mxu0 0.0
    %417 = vmatpush1.msra.mxu0 0.0
    %418 = vmatprep.subr.mxu0 0.0
    %419 = vmatpush1.msra.mxu0 0.0
    %420 = vmatprep.subr.mxu0 0.0
    %421 = vmatpush1.msra.mxu0 0.0
    %422 = vmatprep.subr.mxu0 0.0
    %423 = vmatpush1.msra.mxu0 0.0
    %424 = vmatprep.subr.mxu0 0.0
    %425 = vmatpush1.msra.mxu0 0.0
    %426 = vmatprep.subr.mxu0 0.0
    %427 = vmatpush1.msra.mxu0 0.0
    %428 = vmatprep.subr.mxu0 0.0
    %429 = vmatpush1.msra.mxu0 0.0
    %430 = vmatprep.subr.mxu0 0.0
    %431 = vmatpush1.msra.mxu0 0.0
    %432 = vmatprep.subr.mxu0 0.0
    %433 = vmatpush1.msra.mxu0 0.0
    %434 = vmatprep.subr.mxu0 0.0
    %435 = vmatpush1.msra.mxu0 0.0
    %436 = vmatprep.subr.mxu0 0.0
    %437 = vmatpush1.msra.mxu0 0.0
    %438 = vmatprep.mubr.f32.mxu0 0.0
    %439 = vmatmul.mubr.f32.gmra.mrb[0].mxu0 %v372
    %v440 = vpop.f32.mrb[0].mxu0
    %v441 = vadd.f32 0.0, %v440
    %v442 = vpop.f32.mrb[0].mxu0
    %443 = vdwg.mxu0
    %v444 = vxor.u32 %v441, 2147483648
    %v445 = vmul.f32 %v444, 1.442695
    %v446 = vpow.pop %v445
    %v447 = vadd.f32 %v446, 1.0
    %v448 = vrcp.pop %v447
    %v449 = vmul.f32 1.0, %v448
    %v450 = vmul.f32 %v441, %v449
    %v451 = vstv %s36
    %v453 = vsel %vm370, %v239, 0
    %455 = vmatprep.subr.mxu0 %v336
    %456 = vmatpush1.msra.mxu0 %v335
    %457 = vmatprep.subr.mxu0 0.0
    %458 = vmatpush1.msra.mxu0 0.0
    %459 = vmatprep.subr.mxu0 0.0
    %460 = vmatpush1.msra.mxu0 0.0
    %461 = vmatprep.subr.mxu0 0.0
    %462 = vmatpush1.msra.mxu0 0.0
    %463 = vmatprep.subr.mxu0 0.0
    %464 = vmatpush1.msra.mxu0 0.0
    %465 = vmatprep.subr.mxu0 0.0
    %466 = vmatpush1.msra.mxu0 0.0
    %467 = vmatprep.subr.mxu0 0.0
    %468 = vmatpush1.msra.mxu0 0.0
    %469 = vmatprep.subr.mxu0 0.0
    %470 = vmatpush1.msra.mxu0 0.0
    %471 = vmatprep.subr.mxu0 0.0
    %472 = vmatpush1.msra.mxu0 0.0
    %473 = vmatprep.subr.mxu0 0.0
    %474 = vmatpush1.msra.mxu0 0.0
    %475 = vmatprep.subr.mxu0 0.0
    %476 = vmatpush1.msra.mxu0 0.0
    %477 = vmatprep.subr.mxu0 0.0
    %478 = vmatpush1.msra.mxu0 0.0
    %479 = vmatprep.subr.mxu0 0.0
    %480 = vmatpush1.msra.mxu0 0.0
    %481 = vmatprep.subr.mxu0 0.0
    %482 = vmatpush1.msra.mxu0 0.0
    %483 = vmatprep.subr.mxu0 0.0
    %484 = vmatpush1.msra.mxu0 0.0
    %485 = vmatprep.subr.mxu0 0.0
    %486 = vmatpush1.msra.mxu0 0.0
    %487 = vmatprep.subr.mxu0 0.0
    %488 = vmatpush1.msra.mxu0 0.0
    %489 = vmatprep.subr.mxu0 0.0
    %490 = vmatpush1.msra.mxu0 0.0
    %491 = vmatprep.subr.mxu0 0.0
    %492 = vmatpush1.msra.mxu0 0.0
    %493 = vmatprep.subr.mxu0 0.0
    %494 = vmatpush1.msra.mxu0 0.0
    %495 = vmatprep.subr.mxu0 0.0
    %496 = vmatpush1.msra.mxu0 0.0
    %497 = vmatprep.subr.mxu0 0.0
    %498 = vmatpush1.msra.mxu0 0.0
    %499 = vmatprep.subr.mxu0 0.0
    %500 = vmatpush1.msra.mxu0 0.0
    %501 = vmatprep.subr.mxu0 0.0
    %502 = vmatpush1.msra.mxu0 0.0
    %503 = vmatprep.subr.mxu0 0.0
    %504 = vmatpush1.msra.mxu0 0.0
    %505 = vmatprep.subr.mxu0 0.0
    %506 = vmatpush1.msra.mxu0 0.0
    %507 = vmatprep.subr.mxu0 0.0
    %508 = vmatpush1.msra.mxu0 0.0
    %509 = vmatprep.subr.mxu0 0.0
    %510 = vmatpush1.msra.mxu0 0.0
    %511 = vmatprep.subr.mxu0 0.0
    %512 = vmatpush1.msra.mxu0 0.0
    %513 = vmatprep.subr.mxu0 0.0
    %514 = vmatpush1.msra.mxu0 0.0
    %515 = vmatprep.subr.mxu0 0.0
    %516 = vmatpush1.msra.mxu0 0.0
    %517 = vmatprep.subr.mxu0 0.0
    %518 = vmatpush1.msra.mxu0 0.0
    %519 = vmatprep.mubr.f32.mxu0 0.0
    %520 = vmatmul.mubr.f32.gmra.mrb[0].mxu0 %v453
    %v521 = vpop.f32.mrb[0].mxu0
    %v522 = vadd.f32 %v451, %v521
    %v523 = vpop.f32.mrb[0].mxu0
    %v524 = vadd.f32 %v451, %v523
    %525 = vdwg.mxu0
    %v526 = vxor.u32 %v522, 2147483648
    %v527 = vxor.u32 %v524, 2147483648
    %v528 = vmul.f32 %v526, 1.442695
    %v529 = vpow.pop %v528
    %v530 = vmul.f32 %v527, 1.442695
    %v531 = vpow.pop %v530
    %v532 = vadd.f32 %v529, 1.0
    %v533 = vadd.f32 %v531, 1.0
    %v534 = vrcp.pop %v532
    %v535 = vmul.f32 1.0, %v534
    %v536 = vrcp.pop %v533
    %v537 = vmul.f32 1.0, %v536
    %v538 = vmul.f32 %v522, %v535
    %v539 = vmul.f32 %v524, %v537
    %v540 = vxor.u32 %v538, 2147483648
    %v541 = vxor.u32 %v539, 2147483648
    %v542 = vmul.f32 %v540, 1.442695
    %v543 = vpow.pop %v542
    %v544 = vmul.f32 %v541, 1.442695
    %v545 = vpow.pop %v544
    %v546 = vadd.f32 %v543, 1.0
    %v547 = vadd.f32 %v545, 1.0
    %v548 = vrcp.pop %v546
    %v549 = vmul.f32 1.0, %v548
    %v550 = vrcp.pop %v547
    %v551 = vmul.f32 1.0, %v550
    %553 = vset.pattern.permute.xlu0 0
    %554 = vperm.xlu0 %553, %v450
    %v555 = vpop.permute.xlu0 %554
    %v557 = vlaneseq
    %v558 = vshrl.u32 %v557, 7
    %v559 = vsub.s32 0, %v558
    %v560 = vrot.slane %v549, %v559
    %v561 = vlaneseq
    %v562 = vshrl.u32 %v561, 7
    %v563 = vsub.s32 0, %v562
    %v564 = vrot.slane %v551, %v563
    %v565 = vmul.f32 %v555, %v560
    %v566 = vmul.f32 %v555, %v564
    %v569 = vcombine.low %v565, %v566
    %v571 = vadd.f32 %v40, %v569
    %572 = vst [vmem:[#allocation5] sm:$0xff] %v571
    %v573 = vsel %vm48, %v41, 0
    %v575 = vsel %vm48, %v45, 0
    %577 = vmatprep.subr.mxu0 %v575
    %578 = vmatpush1.msra.mxu0 %v573
    %579 = vmatprep.subr.mxu0 0.0
    %580 = vmatpush1.msra.mxu0 0.0
    %581 = vmatprep.subr.mxu0 0.0
    %582 = vmatpush1.msra.mxu0 0.0
    %583 = vmatprep.subr.mxu0 0.0
    %584 = vmatpush1.msra.mxu0 0.0
    %585 = vmatprep.subr.mxu0 0.0
    %586 = vmatpush1.msra.mxu0 0.0
    %587 = vmatprep.subr.mxu0 0.0
    %588 = vmatpush1.msra.mxu0 0.0
    %589 = vmatprep.subr.mxu0 0.0
    %590 = vmatpush1.msra.mxu0 0.0
    %591 = vmatprep.subr.mxu0 0.0
    %592 = vmatpush1.msra.mxu0 0.0
    %593 = vmatprep.subr.mxu0 0.0
    %594 = vmatpush1.msra.mxu0 0.0
    %595 = vmatprep.subr.mxu0 0.0
    %596 = vmatpush1.msra.mxu0 0.0
    %597 = vmatprep.subr.mxu0 0.0
    %598 = vmatpush1.msra.mxu0 0.0
    %599 = vmatprep.subr.mxu0 0.0
    %600 = vmatpush1.msra.mxu0 0.0
    %601 = vmatprep.subr.mxu0 0.0
    %602 = vmatpush1.msra.mxu0 0.0
    %603 = vmatprep.subr.mxu0 0.0
    %604 = vmatpush1.msra.mxu0 0.0
    %605 = vmatprep.subr.mxu0 0.0
    %606 = vmatpush1.msra.mxu0 0.0
    %607 = vmatprep.subr.mxu0 0.0
    %608 = vmatpush1.msra.mxu0 0.0
    %609 = vmatprep.subr.mxu0 0.0
    %610 = vmatpush1.msra.mxu0 0.0
    %611 = vmatprep.subr.mxu0 0.0
    %612 = vmatpush1.msra.mxu0 0.0
    %613 = vmatprep.subr.mxu0 0.0
    %614 = vmatpush1.msra.mxu0 0.0
    %615 = vmatprep.subr.mxu0 0.0
    %616 = vmatpush1.msra.mxu0 0.0
    %617 = vmatprep.subr.mxu0 0.0
    %618 = vmatpush1.msra.mxu0 0.0
    %619 = vmatprep.subr.mxu0 0.0
    %620 = vmatpush1.msra.mxu0 0.0
    %621 = vmatprep.subr.mxu0 0.0
    %622 = vmatpush1.msra.mxu0 0.0
    %623 = vmatprep.subr.mxu0 0.0
    %624 = vmatpush1.msra.mxu0 0.0
    %625 = vmatprep.subr.mxu0 0.0
    %626 = vmatpush1.msra.mxu0 0.0
    %627 = vmatprep.subr.mxu0 0.0
    %628 = vmatpush1.msra.mxu0 0.0
    %629 = vmatprep.subr.mxu0 0.0
    %630 = vmatpush1.msra.mxu0 0.0
    %631 = vmatprep.subr.mxu0 0.0
    %632 = vmatpush1.msra.mxu0 0.0
    %633 = vmatprep.subr.mxu0 0.0
    %634 = vmatpush1.msra.mxu0 0.0
    %635 = vmatprep.subr.mxu0 0.0
    %636 = vmatpush1.msra.mxu0 0.0
    %637 = vmatprep.subr.mxu0 0.0
    %638 = vmatpush1.msra.mxu0 0.0
    %639 = vmatprep.subr.mxu0 0.0
    %640 = vmatpush1.msra.mxu0 0.0
    %641 = vmatprep.mubr.f32.mxu0 0.0
    %642 = vmatmul.mubr.f32.gmra.mrb[0].mxu0 %v246
    %v643 = vpop.f32.mrb[0].mxu0
    %v644 = vadd.f32 %v243, %v643
    %v645 = vpop.f32.mrb[0].mxu0
    %v646 = vadd.f32 %v243, %v645
    %647 = vdwg.mxu0
    %v648 = vxor.u32 %v644, 2147483648
    %v649 = vxor.u32 %v646, 2147483648
    %v650 = vmul.f32 %v648, 1.442695
    %v651 = vpow.pop %v650
    %v652 = vmul.f32 %v649, 1.442695
    %v653 = vpow.pop %v652
    %v654 = vadd.f32 %v651, 1.0
    %v655 = vadd.f32 %v653, 1.0
    %v656 = vrcp.pop %v654
    %v657 = vmul.f32 1.0, %v656
    %v658 = vrcp.pop %v655
    %v659 = vmul.f32 1.0, %v658
    %v660 = vmul.f32 %v644, %v657
    %v661 = vmul.f32 %v646, %v659
    %v662 = vsel %vm337, %v660, -inf
    %v663 = vsel %vm337, %v661, -inf
    %v664 = vmax.f32 %v662, %v663
    %665 = vmax.xlane.f32.xlu0 %v664
    %v666 = vpop.xlane.xlu0 %665
    %v667 = vsub.f32 %v660, %v666
    %v668 = vsub.f32 %v661, %v666
    %v669 = vmul.f32 %v667, 1.442695
    %v670 = vpow.pop %v669
    %v671 = vmul.f32 %v668, 1.442695
    %v672 = vpow.pop %v671
    %v673 = vsel %vm337, %v670, 0.0
    %v674 = vsel %vm337, %v672, 0.0
    %v675 = vadd.f32 %v673, %v674
    %676 = vadd.xlane.f32.xlu0 %v675
    %v677 = vpop.xlane.xlu0 %676
    %v678 = vrcp.pop %v677
    %v679 = vmul.f32 %v670, %v678
    %v680 = vmul.f32 %v672, %v678
    %v681 = vlaneseq
    %v682 = vshrl.u32 %v681, 7
    %v683 = vsub.s32 4, %v682
    %v684 = vrot.slane %v679, %v683
    %v685 = vlaneseq
    %v686 = vshrl.u32 %v685, 7
    %v687 = vsub.s32 4, %v686
    %v688 = vrot.slane %v680, %v687
    %v689 = vmul.f32 %v660, %v684
    %v690 = vmul.f32 %v661, %v688
    %v691 = vadd.f32 %v689, %v690
    %692 = vadd.xlane.f32.xlu0 %v691
    %v693 = vpop.xlane.xlu0 %692
    %694 = vmatprep.subr.mxu0 0.0
    %695 = vmatpush1.msra.mxu0 %v693
    %696 = vmatprep.subr.mxu0 0.0
    %697 = vmatpush1.msra.mxu0 0.0
    %698 = vmatprep.subr.mxu0 0.0
    %699 = vmatpush1.msra.mxu0 0.0
    %700 = vmatprep.subr.mxu0 0.0
    %701 = vmatpush1.msra.mxu0 0.0
    %702 = vmatprep.subr.mxu0 0.0
    %703 = vmatpush1.msra.mxu0 0.0
    %704 = vmatprep.subr.mxu0 0.0
    %705 = vmatpush1.msra.mxu0 0.0
    %706 = vmatprep.subr.mxu0 0.0
    %707 = vmatpush1.msra.mxu0 0.0
    %708 = vmatprep.subr.mxu0 0.0
    %709 = vmatpush1.msra.mxu0 0.0
    %710 = vmatprep.subr.mxu0 0.0
    %711 = vmatpush1.msra.mxu0 0.0
    %712 = vmatprep.subr.mxu0 0.0
    %713 = vmatpush1.msra.mxu0 0.0
    %714 = vmatprep.subr.mxu0 0.0
    %715 = vmatpush1.msra.mxu0 0.0
    %716 = vmatprep.subr.mxu0 0.0
    %717 = vmatpush1.msra.mxu0 0.0
    %718 = vmatprep.subr.mxu0 0.0
    %719 = vmatpush1.msra.mxu0 0.0
    %720 = vmatprep.subr.mxu0 0.0
    %721 = vmatpush1.msra.mxu0 0.0
    %722 = vmatprep.subr.mxu0 0.0
    %723 = vmatpush1.msra.mxu0 0.0
    %724 = vmatprep.subr.mxu0 0.0
    %725 = vmatpush1.msra.mxu0 0.0
    %726 = vmatprep.subr.mxu0 0.0
    %727 = vmatpush1.msra.mxu0 0.0
    %728 = vmatprep.subr.mxu0 0.0
    %729 = vmatpush1.msra.mxu0 0.0
    %730 = vmatprep.subr.mxu0 0.0
    %731 = vmatpush1.msra.mxu0 0.0
    %732 = vmatprep.subr.mxu0 0.0
    %733 = vmatpush1.msra.mxu0 0.0
    %734 = vmatprep.subr.mxu0 0.0
    %735 = vmatpush1.msra.mxu0 0.0
    %736 = vmatprep.subr.mxu0 0.0
    %737 = vmatpush1.msra.mxu0 0.0
    %738 = vmatprep.subr.mxu0 0.0
    %739 = vmatpush1.msra.mxu0 0.0
    %740 = vmatprep.subr.mxu0 0.0
    %741 = vmatpush1.msra.mxu0 0.0
    %742 = vmatprep.subr.mxu0 0.0
    %743 = vmatpush1.msra.mxu0 0.0
    %744 = vmatprep.subr.mxu0 0.0
    %745 = vmatpush1.msra.mxu0 0.0
    %746 = vmatprep.subr.mxu0 0.0
    %747 = vmatpush1.msra.mxu0 0.0
    %748 = vmatprep.subr.mxu0 0.0
    %749 = vmatpush1.msra.mxu0 0.0
    %750 = vmatprep.subr.mxu0 0.0
    %751 = vmatpush1.msra.mxu0 0.0
    %752 = vmatprep.subr.mxu0 0.0
    %753 = vmatpush1.msra.mxu0 0.0
    %754 = vmatprep.subr.mxu0 0.0
    %755 = vmatpush1.msra.mxu0 0.0
    %756 = vmatprep.subr.mxu0 0.0
    %757 = vmatpush1.msra.mxu0 0.0
    %758 = vmatprep.mubr.f32.mxu0 0.0
    %759 = vmatmul.mubr.f32.gmra.mrb[0].mxu0 %v372
    %v760 = vpop.f32.mrb[0].mxu0
    %v761 = vadd.f32 0.0, %v760
    %v762 = vpop.f32.mrb[0].mxu0
    %763 = vdwg.mxu0
    %v764 = vxor.u32 %v761, 2147483648
    %v765 = vmul.f32 %v764, 1.442695
    %v766 = vpow.pop %v765
    %v767 = vadd.f32 %v766, 1.0
    %v768 = vrcp.pop %v767
    %v769 = vmul.f32 1.0, %v768
    %v770 = vmul.f32 %v761, %v769
    %v771 = vrot.slane %v239, 1
    %v772 = vsel %vm370, %v771, 0
    %774 = vmatprep.subr.mxu0 %v661
    %775 = vmatpush1.msra.mxu0 %v660
    %776 = vmatprep.subr.mxu0 0.0
    %777 = vmatpush1.msra.mxu0 0.0
    %778 = vmatprep.subr.mxu0 0.0
    %779 = vmatpush1.msra.mxu0 0.0
    %780 = vmatprep.subr.mxu0 0.0
    %781 = vmatpush1.msra.mxu0 0.0
    %782 = vmatprep.subr.mxu0 0.0
    %783 = vmatpush1.msra.mxu0 0.0
    %784 = vmatprep.subr.mxu0 0.0
    %785 = vmatpush1.msra.mxu0 0.0
    %786 = vmatprep.subr.mxu0 0.0
    %787 = vmatpush1.msra.mxu0 0.0
    %788 = vmatprep.subr.mxu0 0.0
    %789 = vmatpush1.msra.mxu0 0.0
    %790 = vmatprep.subr.mxu0 0.0
    %791 = vmatpush1.msra.mxu0 0.0
    %792 = vmatprep.subr.mxu0 0.0
    %793 = vmatpush1.msra.mxu0 0.0
    %794 = vmatprep.subr.mxu0 0.0
    %795 = vmatpush1.msra.mxu0 0.0
    %796 = vmatprep.subr.mxu0 0.0
    %797 = vmatpush1.msra.mxu0 0.0
    %798 = vmatprep.subr.mxu0 0.0
    %799 = vmatpush1.msra.mxu0 0.0
    %800 = vmatprep.subr.mxu0 0.0
    %801 = vmatpush1.msra.mxu0 0.0
    %802 = vmatprep.subr.mxu0 0.0
    %803 = vmatpush1.msra.mxu0 0.0
    %804 = vmatprep.subr.mxu0 0.0
    %805 = vmatpush1.msra.mxu0 0.0
    %806 = vmatprep.subr.mxu0 0.0
    %807 = vmatpush1.msra.mxu0 0.0
    %808 = vmatprep.subr.mxu0 0.0
    %809 = vmatpush1.msra.mxu0 0.0
    %810 = vmatprep.subr.mxu0 0.0
    %811 = vmatpush1.msra.mxu0 0.0
    %812 = vmatprep.subr.mxu0 0.0
    %813 = vmatpush1.msra.mxu0 0.0
    %814 = vmatprep.subr.mxu0 0.0
    %815 = vmatpush1.msra.mxu0 0.0
    %816 = vmatprep.subr.mxu0 0.0
    %817 = vmatpush1.msra.mxu0 0.0
    %818 = vmatprep.subr.mxu0 0.0
    %819 = vmatpush1.msra.mxu0 0.0
    %820 = vmatprep.subr.mxu0 0.0
    %821 = vmatpush1.msra.mxu0 0.0
    %822 = vmatprep.subr.mxu0 0.0
    %823 = vmatpush1.msra.mxu0 0.0
    %824 = vmatprep.subr.mxu0 0.0
    %825 = vmatpush1.msra.mxu0 0.0
    %826 = vmatprep.subr.mxu0 0.0
    %827 = vmatpush1.msra.mxu0 0.0
    %828 = vmatprep.subr.mxu0 0.0
    %829 = vmatpush1.msra.mxu0 0.0
    %830 = vmatprep.subr.mxu0 0.0
    %831 = vmatpush1.msra.mxu0 0.0
    %832 = vmatprep.subr.mxu0 0.0
    %833 = vmatpush1.msra.mxu0 0.0
    %834 = vmatprep.subr.mxu0 0.0
    %835 = vmatpush1.msra.mxu0 0.0
    %836 = vmatprep.subr.mxu0 0.0
    %837 = vmatpush1.msra.mxu0 0.0
    %838 = vmatprep.mubr.f32.mxu0 0.0
    %839 = vmatmul.mubr.f32.gmra.mrb[0].mxu0 %v772
    %v840 = vpop.f32.mrb[0].mxu0
    %v841 = vadd.f32 %v451, %v840
    %v842 = vpop.f32.mrb[0].mxu0
    %v843 = vadd.f32 %v451, %v842
    %844 = vdwg.mxu0
    %v845 = vxor.u32 %v841, 2147483648
    %v846 = vxor.u32 %v843, 2147483648
    %v847 = vmul.f32 %v845, 1.442695
    %v848 = vpow.pop %v847
    %v849 = vmul.f32 %v846, 1.442695
    %v850 = vpow.pop %v849
    %v851 = vadd.f32 %v848, 1.0
    %v852 = vadd.f32 %v850, 1.0
    %v853 = vrcp.pop %v851
    %v854 = vmul.f32 1.0, %v853
    %v855 = vrcp.pop %v852
    %v856 = vmul.f32 1.0, %v855
    %v857 = vmul.f32 %v841, %v854
    %v858 = vmul.f32 %v843, %v856
    %v859 = vxor.u32 %v857, 2147483648
    %v860 = vxor.u32 %v858, 2147483648
    %v861 = vmul.f32 %v859, 1.442695
    %v862 = vpow.pop %v861
    %v863 = vmul.f32 %v860, 1.442695
    %v864 = vpow.pop %v863
    %v865 = vadd.f32 %v862, 1.0
    %v866 = vadd.f32 %v864, 1.0
    %v867 = vrcp.pop %v865
    %v868 = vmul.f32 1.0, %v867
    %v869 = vrcp.pop %v866
    %v870 = vmul.f32 1.0, %v869
    %872 = vset.pattern.permute.xlu0 0
    %873 = vperm.xlu0 %872, %v770
    %v874 = vpop.permute.xlu0 %873
    %v876 = vlaneseq
    %v877 = vshrl.u32 %v876, 7
    %v878 = vsub.s32 0, %v877
    %v879 = vrot.slane %v868, %v878
    %v880 = vlaneseq
    %v881 = vshrl.u32 %v880, 7
    %v882 = vsub.s32 0, %v881
    %v883 = vrot.slane %v870, %v882
    %v884 = vmul.f32 %v874, %v879
    %v885 = vmul.f32 %v874, %v883
    %v888 = vcombine.low %v884, %v885
    %v890 = vadd.f32 %v41, %v888
    %s891 = scalar_lea.vmem [#allocation5], 8
    %892 = vst [vmem:[%s891] sm:$0xff] %v890
    // Predicated region
    $region26: #{tpu_custom_call.1} parent=1 // pred_check
      _
    $region27: #{tpu_custom_call.1} parent=1 // pred_check_branch
      %894 = sbr.rel (0) target = $region29
    $region28: #{tpu_custom_call.1} parent=1 // pred_region
      %s896 = ssub.s32 256, 256
      %897 = vsyncadd [#allocation3], %s896
      %s898 = sshll.u32 [#allocation5], 4
      %s899 = int_to_ptr.vmem [resolvable:$true] %s898
      %904 = dma.vmem_to_hbm [thread:$0]  %s899, 256, %s5, [#allocation3], 128, 128, 8
    $region29: #{tpu_custom_call.1} parent=1 // pred_fallthru
      _
    // Predicated region
    $region30: #{tpu_custom_call.1} parent=1 // pred_check
      _
    $region31: #{tpu_custom_call.1} parent=1 // pred_check_branch
      %906 = sbr.rel (0) target = $region33
    $region32: #{tpu_custom_call.1} parent=1 // pred_region
      %907 = dma.done [#allocation3], 256
    $region33: #{tpu_custom_call.1} parent=1 // pred_fallthru
      _
    %908 = vsyncpa [#allocation3], 1
    %909 = vsyncpa [#allocation4], 1

</llo_original>
